<compile_context>
chip_gen: v6e
topology: v6e:2x2x1
jax: 0.10.0
libtpu: 0.0.40
codegen_flags: <defaults>
</compile_context>

<pallas_src>
import functools

import jax
import jax.numpy as jnp
from jax.experimental import pallas as pl
from jax.experimental.pallas import tpu as pltpu


def _round_up(x, m):
    return ((x + m - 1) // m) * m


def _tpu_vmem_capacity():
    try:
        return int(pltpu.get_tpu_info().vmem_capacity_bytes)
    except Exception:
        return 128 * 1024 * 1024


def _vmem_limit_bytes():
    # ~75% of physical VMEM, capped at 96 MiB: ~48 MiB on v7x (64 MiB/TC),
    # 96 MiB on v5e/v6e (128 MiB).  Derived at trace time, not hard-coded.
    cap = _tpu_vmem_capacity()
    return max(32 * 1024 * 1024, min(cap * 3 // 4, 96 * 1024 * 1024))


def _default_tiles():
    cap = _tpu_vmem_capacity()
    if cap >= 96 * 1024 * 1024:      # v5e / v6e: 128 MiB physical VMEM
        return 256, 512
    return 128, 512                  # v7x: 64 MiB VMEM per TensorCore


def _choose_tiles(n, tile_dst, tile_src):
    """Pick (n_pad, tile_dst, tile_src) satisfying the (8,128) block rules."""
    n8 = _round_up(n, 8)
    td = min(tile_dst, n8)
    n_pad = _round_up(n8, td)
    if n_pad <= tile_src:
        ts = n_pad                   # full src axis per block (== array dim)
    else:
        ts = tile_src                # multiple of 128
        n_pad = _round_up(n_pad, ts)
    assert n_pad % td == 0 and n_pad % ts == 0
    return n_pad, td, ts


# ----------------------------------------------------------------------------
# Pallas kernel: GATv2 attention + aggregation for one layer.
# Grid: (dst blocks [parallel], src blocks [arbitrary, online softmax]).
#   att_ref   : [2*H*C]          SMEM scalars: att and att*negative_slope
#   xl_t_ref  : [H*C, TS]        x @ W_l transposed (f32, streamed over src)
#   xl_bf_ref : [TS, H*C]        x @ W_l (bf16, streamed over src; matmul RHS)
#   xr_ref    : [TD, H*C]        x @ W_r dst block (f32, constant over src)
#   mask_ref  : [TD, TS]         int8 adjacency block (streamed)
# output:
#   out_ref   : [TD, SLAB_W]     lane-dense slab: out | m | l | zero pad
# scratch:
#   m_sc, l_sc: [TD, H] f32      online-softmax running max / denom
#   acc_sc    : [TD, H*C] f32    running weighted sum
# ----------------------------------------------------------------------------
def _gatv2_attn_kernel(att_ref, xl_t_ref, xl_bf_ref, xr_ref, mask_ref,
                       out_ref, m_sc, l_sc, acc_sc, *,
                       num_heads, out_ch, slab_w):
    j = pl.program_id(1)
    nj = pl.num_programs(1)
    hc = num_heads * out_ch

    @pl.when(j == 0)
    def _():
        m_sc[...] = jnp.full(m_sc.shape, -jnp.inf, dtype=jnp.float32)
        l_sc[...] = jnp.zeros(l_sc.shape, dtype=jnp.float32)
        acc_sc[...] = jnp.zeros(acc_sc.shape, dtype=jnp.float32)

    # Additive mask bias (0 on edges, -1e30 elsewhere), computed once per block
    # and reused by every head.  Finite (not -inf) so the online-softmax rescale
    # exp(m_old - m_new) never produces NaN on fully-masked tiles.
    neg_bias = (mask_ref[...].astype(jnp.float32) - 1.0) * 1e30   # [TD, TS]

    xr = xr_ref[...]                                              # [TD, HC] f32
    xl_t = xl_t_ref[...]                                          # [HC, TS] f32

    # TODO(synk): on v6e/v7x this VALU-bound loop could run in packed bf16
    #             (with a final f32 where(mask, ., -inf)) for ~2x fewer bundles.
    for h in range(num_heads):                                    # static, small
        e = neg_bias
        for c in range(out_ch):                                   # static, small
            k = h * out_ch + c
            a_pos = att_ref[k]                                    # att[h, c]
            a_neg = att_ref[hc + k]                               # att[h, c]*slope
            # s[d, j] = xl[j, k] + xr[d, k]   (src on lanes, dst on sublanes)
            t = xl_t[k:k + 1, :] + xr[:, k:k + 1]                 # [TD, TS]
            # att * leaky_relu(t) == where(t>=0, att, att*slope) * t  (fused)
            e = e + jnp.where(t >= 0, a_pos, a_neg) * t

        m_old = m_sc[:, h:h + 1]                                  # [TD, 1]
        m_new = jnp.maximum(m_old, jnp.max(e, axis=-1, keepdims=True))
        scale = jnp.exp(m_old - m_new)                            # online rescale
        p = jnp.exp(e - m_new)                                    # [TD, TS]
        l_sc[:, h:h + 1] = scale * l_sc[:, h:h + 1] + jnp.sum(
            p, axis=-1, keepdims=True)
        acc_sc[:, h * out_ch:(h + 1) * out_ch] = (
            scale * acc_sc[:, h * out_ch:(h + 1) * out_ch]
            + jnp.dot(p.astype(jnp.bfloat16),
                      xl_bf_ref[:, h * out_ch:(h + 1) * out_ch],
                      preferred_element_type=jnp.float32))        # [TD, C]
        m_sc[:, h:h + 1] = m_new

    @pl.when(j == nj - 1)
    def _():
        inv_l = 1.0 / l_sc[...]                                   # exact divide
        pieces = [acc_sc[:, h * out_ch:(h + 1) * out_ch] * inv_l[:, h:h + 1]
                  for h in range(num_heads)]
        pieces += [m_sc[...], l_sc[...]]
        pad_w = slab_w - (hc + 2 * num_heads)
        if pad_w > 0:
            pieces.append(jnp.zeros((out_ref.shape[0], pad_w), jnp.float32))
        out_ref[...] = jnp.concatenate(pieces, axis=1)            # one full vst


def gatv2_conv_layer(x_pad, w_l, w_r, att, mask_i8, num_heads, out_ch,
                     *, tile_dst, tile_src):
    """One GATv2Conv layer. x_pad: [N_pad, F_in] f32, mask_i8: [N_pad, N_pad]."""
    n_pad = x_pad.shape[0]
    hc = num_heads * out_ch
    td, ts = tile_dst, tile_src
    assert n_pad % td == 0 and n_pad % ts == 0

    # Loop-invariant projections hoisted out of the kernel (computed once).
    xl = x_pad @ w_l                       # [N_pad, H*C] f32 (attention + alpha)
    xr = x_pad @ w_r                       # [N_pad, H*C] f32
    xl_t = xl.T                            # [H*C, N_pad] f32, src axis on lanes
    xl_bf = xl.astype(jnp.bfloat16)        # [N_pad, H*C] bf16, aggregation RHS

    slope = 0.2
    att_flat = att.reshape(-1)
    att_tab = jnp.concatenate([att_flat, att_flat * slope])       # [2*H*C] SMEM

    slab_w = _round_up(hc + 2 * num_heads, 128)                   # lane-dense out

    kernel = functools.partial(_gatv2_attn_kernel, num_heads=num_heads,
                               out_ch=out_ch, slab_w=slab_w)

    slab = pl.pallas_call(
        kernel,
        grid=(n_pad // td, n_pad // ts),
        in_specs=[
            pl.BlockSpec(memory_space=pltpu.MemorySpace.SMEM),    # att table
            pl.BlockSpec((hc, ts), lambda i, j: (0, j)),          # xl^T src blk
            pl.BlockSpec((ts, hc), lambda i, j: (j, 0)),          # xl bf16 src blk
            pl.BlockSpec((td, hc), lambda i, j: (i, 0)),          # xr dst blk
            pl.BlockSpec((td, ts), lambda i, j: (i, j)),          # int8 mask blk
        ],
        out_specs=pl.BlockSpec((td, slab_w), lambda i, j: (i, 0)),
        out_shape=jax.ShapeDtypeStruct((n_pad, slab_w), jnp.float32),
        scratch_shapes=[
            pltpu.VMEM((td, num_heads), jnp.float32),             # m
            pltpu.VMEM((td, num_heads), jnp.float32),             # l
            pltpu.VMEM((td, hc), jnp.float32),                    # acc
        ],
        compiler_params=pltpu.CompilerParams(
            # dst blocks are independent -> shard across v7x's two TensorCores;
            # src axis carries the online-softmax state -> arbitrary.
            dimension_semantics=("parallel", "arbitrary"),
            vmem_limit_bytes=_vmem_limit_bytes(),
        ),
    )(att_tab, xl_t, xl_bf, xr, mask_i8)

    out = slab[:, :hc]
    m = slab[:, hc:hc + num_heads]
    l = slab[:, hc + num_heads:hc + 2 * num_heads]
    return out, m, l, xl, xr


# ----------------------------------------------------------------------------
# Parameter init (xavier_normal_, matching the PyTorch __init__ shapes)
# ----------------------------------------------------------------------------
def init_params(key, num_layers, dims, heads):
    params = []
    for j in range(num_layers):
        fin = dims[j] * heads[j]
        h, c = heads[j + 1], dims[j + 1]
        key, k1, k2, k3 = jax.random.split(key, 4)
        std_lin = (2.0 / (fin + h * c)) ** 0.5          # xavier_normal lin_l/lin_r
        w_l = std_lin * jax.random.normal(k1, (fin, h * c), jnp.float32)
        w_r = std_lin * jax.random.normal(k2, (fin, h * c), jnp.float32)
        std_att = (2.0 / (h * c + c)) ** 0.5            # xavier_normal att (1,H,C)
        att = std_att * jax.random.normal(k3, (h, c), jnp.float32)
        params.append((w_l, w_r, att))
    return params


# ----------------------------------------------------------------------------
# GATv2.forward equivalent
# ----------------------------------------------------------------------------
def gatv2_forward(x, edge_index, params, heads, dims, concat,
                  tile_dst=None, tile_src=None):
    n = x.shape[0]
    if tile_dst is None or tile_src is None:
        dflt_td, dflt_ts = _default_tiles()
        tile_dst = tile_dst or dflt_td
        tile_src = tile_src or dflt_ts

    # add self loops (PyG GATv2Conv default), appended after the original edges
    self_loops = jnp.stack([jnp.arange(n, dtype=edge_index.dtype)] * 2, axis=0)
    ei = jnp.concatenate([edge_index, self_loops], axis=1)        # [2, E + N]
    src, dst = ei[0], ei[1]

    n_pad, td, ts = _choose_tiles(n, tile_dst, tile_src)

    # int8 adjacency mask (4x less HBM traffic than f32).  Padded rows only get
    # a self loop so their softmax stays finite; padded outputs are sliced away.
    # TODO(synk): duplicate edges in edge_index collapse in this dense mask;
    #             PyG's scatter-softmax would count multi-edges separately.
    mask = jnp.zeros((n_pad, n_pad), jnp.int8)
    mask = mask.at[jnp.arange(n_pad), jnp.arange(n_pad)].set(1)
    mask = mask.at[dst, src].set(1)

    slope = 0.2
    attn_coef = []
    num_layers = len(params)
    x_cur = x
    for li, (w_l, w_r, att) in enumerate(params):
        h, c = heads[li + 1], dims[li + 1]
        f_in = x_cur.shape[1]
        x_pad = jnp.zeros((n_pad, f_in), jnp.float32).at[:n].set(x_cur)

        out_pad, m_pad, l_pad, xl, xr = gatv2_conv_layer(
            x_pad, w_l, w_r, att, mask, h, c, tile_dst=td, tile_src=ts)
        out = out_pad[:n]

        # Per-edge attention coefficients (PyG return_attention_weights=True),
        # rebuilt on the O(E) edge list from the SAME f32 projections the kernel
        # consumed and the kernel's per-row softmax stats -> exact consistency.
        s_e = (xl[src] + xr[dst]).reshape(-1, h, c)
        att_b = att[None, :, :]
        e_e = jnp.sum(jnp.where(s_e >= 0, att_b, att_b * slope) * s_e, axis=-1)
        alpha_e = jnp.exp(e_e - m_pad[dst]) / l_pad[dst]          # [E', H]
        attn_coef.append((ei, alpha_e))

        if concat[li]:
            x_cur = out                                   # [N, H*C]
        else:
            x_cur = out.reshape(n, h, c).mean(axis=1)     # [N, C]
        if li < num_layers - 1:
            x_cur = jnp.maximum(x_cur, 0.0)               # relu between layers
            # attnDropout = 0 in this config, so no dropout applied
    # TODO(synk): for tiny configs both layers could be fused into one
    #             pallas_call so x never round-trips HBM between layers.
    return x_cur, attn_coef


if __name__ == "__main__":
    # GATv2(numLayers=2, dims=[4,8,4], heads=[1,2,2], concat=[True,False],
    #       weightSharing=False, attnDropout=0, bias=False, activation='relu')
    num_layers = 2
    dims = [4, 8, 4]
    heads = [1, 2, 2]
    concat = [True, False]

    N, E = 8, 12
    key = jax.random.PRNGKey(0)
    kx, kp = jax.random.split(key, 2)
    x = jax.random.normal(kx, (N, dims[0] * heads[0]), jnp.float32)

    # deterministic directed edge list (src -> dst), no duplicates, no self loops
    src = jnp.array([0, 1, 2, 3, 4, 5, 6, 7, 0, 2, 5, 6], dtype=jnp.int32)
    dst = jnp.array([1, 2, 3, 4, 5, 6, 7, 0, 2, 5, 1, 3], dtype=jnp.int32)
    edge_index = jnp.stack([src, dst], axis=0)

    params = init_params(kp, num_layers, dims, heads)

    out, attn = gatv2_forward(x, edge_index, params, heads, dims, concat)
    jax.block_until_ready(out)
    for ei, a in attn:
        jax.block_until_ready(a)

    assert out.shape == (N, dims[-1])
    assert attn[0][1].shape == (E + N, heads[1])
    assert attn[1][1].shape == (E + N, heads[2])
    # sanity: attention over incoming edges of each destination sums to ~1
    # (tight tolerance: alpha is rebuilt from the exact projections/stats the
    # kernel used).
    for (ei_l, a_l), h_l in zip(attn, (heads[1], heads[2])):
        rowsum = jnp.zeros((N, h_l), jnp.float32).at[ei_l[1]].add(a_l)
        assert bool(jnp.all(jnp.abs(rowsum - 1.0) < 1e-3))
    assert bool(jnp.all(jnp.isfinite(out)))
    print("KERNEL_OK")
</pallas_src>

<mosaic_0001>
module attributes {stable_mosaic.version = 11 : i64} {
  func.func @_gatv2_attn_kernel(%arg0: i32, %arg1: i32, %arg2: memref<32xf32, #tpu.memory_space<smem>>, %arg3: memref<16x8xf32, #tpu.memory_space<vmem>>, %arg4: memref<8x16xbf16, #tpu.memory_space<vmem>>, %arg5: memref<8x16xf32, #tpu.memory_space<vmem>>, %arg6: memref<8x8xi8, #tpu.memory_space<vmem>>, %arg7: memref<8x128xf32, #tpu.memory_space<vmem>>, %arg8: memref<8x2xf32, #tpu.memory_space<vmem>>, %arg9: memref<8x2xf32, #tpu.memory_space<vmem>>, %arg10: memref<8x16xf32, #tpu.memory_space<vmem>>) attributes {dimension_semantics = [#tpu.dimension_semantics<parallel>, #tpu.dimension_semantics<arbitrary>], iteration_bounds = array<i64: 1, 1>, scalar_prefetch = 0 : i64, scratch_operands = 3 : i64, tpu.core_type = #tpu.core_type<tc>, window_params = [{transform_indices = @transform_0, window_bounds = array<i64: 32>}, {transform_indices = @transform_1, window_bounds = array<i64: 16, 8>}, {transform_indices = @transform_2, window_bounds = array<i64: 8, 16>}, {transform_indices = @transform_3, window_bounds = array<i64: 8, 16>}, {transform_indices = @transform_4, window_bounds = array<i64: 8, 8>}, {transform_indices = @transform_5, window_bounds = array<i64: 8, 128>}]} {
    %c0_i32 = arith.constant 0 : i32
    %0 = arith.cmpi eq, %arg1, %c0_i32 : i32
    %1 = arith.extui %0 : i1 to i32
    %c0_i32_0 = arith.constant 0 : i32
    %2 = arith.cmpi ne, %1, %c0_i32_0 : i32
    scf.if %2 {
      %cst_60 = arith.constant 0xFF800000 : f32
      %286 = vector.broadcast %cst_60 : f32 to vector<8x2xf32>
      %c0_61 = arith.constant 0 : index
      %c0_62 = arith.constant 0 : index
      %287 = vector.load %arg8[%c0_61, %c0_62] : memref<8x2xf32, #tpu.memory_space<vmem>>, vector<8x2xf32>
      tpu.vector_store %arg8[%c0_61, %c0_62], %286 {strides = array<i32>} : memref<8x2xf32, #tpu.memory_space<vmem>>, vector<8x2xf32>,
      %cst_63 = arith.constant 0.000000e+00 : f32
      %288 = vector.broadcast %cst_63 : f32 to vector<8x2xf32>
      %c0_64 = arith.constant 0 : index
      %c0_65 = arith.constant 0 : index
      %289 = vector.load %arg9[%c0_64, %c0_65] : memref<8x2xf32, #tpu.memory_space<vmem>>, vector<8x2xf32>
      tpu.vector_store %arg9[%c0_64, %c0_65], %288 {strides = array<i32>} : memref<8x2xf32, #tpu.memory_space<vmem>>, vector<8x2xf32>,
      %cst_66 = arith.constant 0.000000e+00 : f32
      %290 = vector.broadcast %cst_66 : f32 to vector<8x16xf32>
      %c0_67 = arith.constant 0 : index
      %c0_68 = arith.constant 0 : index
      %291 = vector.load %arg10[%c0_67, %c0_68] : memref<8x16xf32, #tpu.memory_space<vmem>>, vector<8x16xf32>
      tpu.vector_store %arg10[%c0_67, %c0_68], %290 {strides = array<i32>} : memref<8x16xf32, #tpu.memory_space<vmem>>, vector<8x16xf32>,
    } else {
    }
    %c0 = arith.constant 0 : index
    %c0_1 = arith.constant 0 : index
    %3 = vector.load %arg6[%c0, %c0_1] : memref<8x8xi8, #tpu.memory_space<vmem>>, vector<8x8xi8>
    %4 = arith.sitofp %3 : vector<8x8xi8> to vector<8x8xf32>
    %cst = arith.constant 1.000000e+00 : f32
    %5 = vector.broadcast %cst : f32 to vector<8x8xf32>
    %6 = arith.subf %4, %5 : vector<8x8xf32>
    %cst_2 = arith.constant 1.000000e+30 : f32
    %7 = vector.broadcast %cst_2 : f32 to vector<8x8xf32>
    %8 = arith.mulf %6, %7 : vector<8x8xf32>
    %c0_3 = arith.constant 0 : index
    %c0_4 = arith.constant 0 : index
    %9 = vector.load %arg5[%c0_3, %c0_4] : memref<8x16xf32, #tpu.memory_space<vmem>>, vector<8x16xf32>
    %c0_5 = arith.constant 0 : index
    %c0_6 = arith.constant 0 : index
    %10 = vector.load %arg3[%c0_5, %c0_6] : memref<16x8xf32, #tpu.memory_space<vmem>>, vector<16x8xf32>
    %c0_7 = arith.constant 0 : index
    %11 = memref.load %arg2[%c0_7] : memref<32xf32, #tpu.memory_space<smem>>
    %c16 = arith.constant 16 : index
    %12 = memref.load %arg2[%c16] : memref<32xf32, #tpu.memory_space<smem>>
    %13 = vector.extract_strided_slice %10 {offsets = [0, 0], sizes = [1, 8], strides = [1, 1]} : vector<16x8xf32> to vector<1x8xf32>
    %14 = vector.extract_strided_slice %9 {offsets = [0, 0], sizes = [8, 1], strides = [1, 1]} : vector<8x16xf32> to vector<8x1xf32>
    %15 = vector.broadcast %13 : vector<1x8xf32> to vector<8x8xf32>
    %16 = vector.broadcast %14 : vector<8x1xf32> to vector<8x8xf32>
    %17 = arith.addf %15, %16 : vector<8x8xf32>
    %cst_8 = arith.constant 0.000000e+00 : f32
    %18 = vector.broadcast %cst_8 : f32 to vector<8x8xf32>
    %19 = arith.cmpf oge, %17, %18 : vector<8x8xf32>
    %20 = vector.broadcast %11 : f32 to vector<8x8xf32>
    %21 = vector.broadcast %12 : f32 to vector<8x8xf32>
    %22 = arith.select %19, %20, %21 : vector<8x8xi1>, vector<8x8xf32>
    %23 = arith.mulf %22, %17 : vector<8x8xf32>
    %24 = arith.addf %8, %23 : vector<8x8xf32>
    %c1 = arith.constant 1 : index
    %25 = memref.load %arg2[%c1] : memref<32xf32, #tpu.memory_space<smem>>
    %c17 = arith.constant 17 : index
    %26 = memref.load %arg2[%c17] : memref<32xf32, #tpu.memory_space<smem>>
    %27 = vector.extract_strided_slice %10 {offsets = [1, 0], sizes = [1, 8], strides = [1, 1]} : vector<16x8xf32> to vector<1x8xf32>
    %28 = vector.extract_strided_slice %9 {offsets = [0, 1], sizes = [8, 1], strides = [1, 1]} : vector<8x16xf32> to vector<8x1xf32>
    %29 = vector.broadcast %27 : vector<1x8xf32> to vector<8x8xf32>
    %30 = vector.broadcast %28 : vector<8x1xf32> to vector<8x8xf32>
    %31 = arith.addf %29, %30 : vector<8x8xf32>
    %cst_9 = arith.constant 0.000000e+00 : f32
    %32 = vector.broadcast %cst_9 : f32 to vector<8x8xf32>
    %33 = arith.cmpf oge, %31, %32 : vector<8x8xf32>
    %34 = vector.broadcast %25 : f32 to vector<8x8xf32>
    %35 = vector.broadcast %26 : f32 to vector<8x8xf32>
    %36 = arith.select %33, %34, %35 : vector<8x8xi1>, vector<8x8xf32>
    %37 = arith.mulf %36, %31 : vector<8x8xf32>
    %38 = arith.addf %24, %37 : vector<8x8xf32>
    %c2 = arith.constant 2 : index
    %39 = memref.load %arg2[%c2] : memref<32xf32, #tpu.memory_space<smem>>
    %c18 = arith.constant 18 : index
    %40 = memref.load %arg2[%c18] : memref<32xf32, #tpu.memory_space<smem>>
    %41 = vector.extract_strided_slice %10 {offsets = [2, 0], sizes = [1, 8], strides = [1, 1]} : vector<16x8xf32> to vector<1x8xf32>
    %42 = vector.extract_strided_slice %9 {offsets = [0, 2], sizes = [8, 1], strides = [1, 1]} : vector<8x16xf32> to vector<8x1xf32>
    %43 = vector.broadcast %41 : vector<1x8xf32> to vector<8x8xf32>
    %44 = vector.broadcast %42 : vector<8x1xf32> to vector<8x8xf32>
    %45 = arith.addf %43, %44 : vector<8x8xf32>
    %cst_10 = arith.constant 0.000000e+00 : f32
    %46 = vector.broadcast %cst_10 : f32 to vector<8x8xf32>
    %47 = arith.cmpf oge, %45, %46 : vector<8x8xf32>
    %48 = vector.broadcast %39 : f32 to vector<8x8xf32>
    %49 = vector.broadcast %40 : f32 to vector<8x8xf32>
    %50 = arith.select %47, %48, %49 : vector<8x8xi1>, vector<8x8xf32>
    %51 = arith.mulf %50, %45 : vector<8x8xf32>
    %52 = arith.addf %38, %51 : vector<8x8xf32>
    %c3 = arith.constant 3 : index
    %53 = memref.load %arg2[%c3] : memref<32xf32, #tpu.memory_space<smem>>
    %c19 = arith.constant 19 : index
    %54 = memref.load %arg2[%c19] : memref<32xf32, #tpu.memory_space<smem>>
    %55 = vector.extract_strided_slice %10 {offsets = [3, 0], sizes = [1, 8], strides = [1, 1]} : vector<16x8xf32> to vector<1x8xf32>
    %56 = vector.extract_strided_slice %9 {offsets = [0, 3], sizes = [8, 1], strides = [1, 1]} : vector<8x16xf32> to vector<8x1xf32>
    %57 = vector.broadcast %55 : vector<1x8xf32> to vector<8x8xf32>
    %58 = vector.broadcast %56 : vector<8x1xf32> to vector<8x8xf32>
    %59 = arith.addf %57, %58 : vector<8x8xf32>
    %cst_11 = arith.constant 0.000000e+00 : f32
    %60 = vector.broadcast %cst_11 : f32 to vector<8x8xf32>
    %61 = arith.cmpf oge, %59, %60 : vector<8x8xf32>
    %62 = vector.broadcast %53 : f32 to vector<8x8xf32>
    %63 = vector.broadcast %54 : f32 to vector<8x8xf32>
    %64 = arith.select %61, %62, %63 : vector<8x8xi1>, vector<8x8xf32>
    %65 = arith.mulf %64, %59 : vector<8x8xf32>
    %66 = arith.addf %52, %65 : vector<8x8xf32>
    %c4 = arith.constant 4 : index
    %67 = memref.load %arg2[%c4] : memref<32xf32, #tpu.memory_space<smem>>
    %c20 = arith.constant 20 : index
    %68 = memref.load %arg2[%c20] : memref<32xf32, #tpu.memory_space<smem>>
    %69 = vector.extract_strided_slice %10 {offsets = [4, 0], sizes = [1, 8], strides = [1, 1]} : vector<16x8xf32> to vector<1x8xf32>
    %70 = vector.extract_strided_slice %9 {offsets = [0, 4], sizes = [8, 1], strides = [1, 1]} : vector<8x16xf32> to vector<8x1xf32>
    %71 = vector.broadcast %69 : vector<1x8xf32> to vector<8x8xf32>
    %72 = vector.broadcast %70 : vector<8x1xf32> to vector<8x8xf32>
    %73 = arith.addf %71, %72 : vector<8x8xf32>
    %cst_12 = arith.constant 0.000000e+00 : f32
    %74 = vector.broadcast %cst_12 : f32 to vector<8x8xf32>
    %75 = arith.cmpf oge, %73, %74 : vector<8x8xf32>
    %76 = vector.broadcast %67 : f32 to vector<8x8xf32>
    %77 = vector.broadcast %68 : f32 to vector<8x8xf32>
    %78 = arith.select %75, %76, %77 : vector<8x8xi1>, vector<8x8xf32>
    %79 = arith.mulf %78, %73 : vector<8x8xf32>
    %80 = arith.addf %66, %79 : vector<8x8xf32>
    %c5 = arith.constant 5 : index
    %81 = memref.load %arg2[%c5] : memref<32xf32, #tpu.memory_space<smem>>
    %c21 = arith.constant 21 : index
    %82 = memref.load %arg2[%c21] : memref<32xf32, #tpu.memory_space<smem>>
    %83 = vector.extract_strided_slice %10 {offsets = [5, 0], sizes = [1, 8], strides = [1, 1]} : vector<16x8xf32> to vector<1x8xf32>
    %84 = vector.extract_strided_slice %9 {offsets = [0, 5], sizes = [8, 1], strides = [1, 1]} : vector<8x16xf32> to vector<8x1xf32>
    %85 = vector.broadcast %83 : vector<1x8xf32> to vector<8x8xf32>
    %86 = vector.broadcast %84 : vector<8x1xf32> to vector<8x8xf32>
    %87 = arith.addf %85, %86 : vector<8x8xf32>
    %cst_13 = arith.constant 0.000000e+00 : f32
    %88 = vector.broadcast %cst_13 : f32 to vector<8x8xf32>
    %89 = arith.cmpf oge, %87, %88 : vector<8x8xf32>
    %90 = vector.broadcast %81 : f32 to vector<8x8xf32>
    %91 = vector.broadcast %82 : f32 to vector<8x8xf32>
    %92 = arith.select %89, %90, %91 : vector<8x8xi1>, vector<8x8xf32>
    %93 = arith.mulf %92, %87 : vector<8x8xf32>
    %94 = arith.addf %80, %93 : vector<8x8xf32>
    %c6 = arith.constant 6 : index
    %95 = memref.load %arg2[%c6] : memref<32xf32, #tpu.memory_space<smem>>
    %c22 = arith.constant 22 : index
    %96 = memref.load %arg2[%c22] : memref<32xf32, #tpu.memory_space<smem>>
    %97 = vector.extract_strided_slice %10 {offsets = [6, 0], sizes = [1, 8], strides = [1, 1]} : vector<16x8xf32> to vector<1x8xf32>
    %98 = vector.extract_strided_slice %9 {offsets = [0, 6], sizes = [8, 1], strides = [1, 1]} : vector<8x16xf32> to vector<8x1xf32>
    %99 = vector.broadcast %97 : vector<1x8xf32> to vector<8x8xf32>
    %100 = vector.broadcast %98 : vector<8x1xf32> to vector<8x8xf32>
    %101 = arith.addf %99, %100 : vector<8x8xf32>
    %cst_14 = arith.constant 0.000000e+00 : f32
    %102 = vector.broadcast %cst_14 : f32 to vector<8x8xf32>
    %103 = arith.cmpf oge, %101, %102 : vector<8x8xf32>
    %104 = vector.broadcast %95 : f32 to vector<8x8xf32>
    %105 = vector.broadcast %96 : f32 to vector<8x8xf32>
    %106 = arith.select %103, %104, %105 : vector<8x8xi1>, vector<8x8xf32>
    %107 = arith.mulf %106, %101 : vector<8x8xf32>
    %108 = arith.addf %94, %107 : vector<8x8xf32>
    %c7 = arith.constant 7 : index
    %109 = memref.load %arg2[%c7] : memref<32xf32, #tpu.memory_space<smem>>
    %c23 = arith.constant 23 : index
    %110 = memref.load %arg2[%c23] : memref<32xf32, #tpu.memory_space<smem>>
    %111 = vector.extract_strided_slice %10 {offsets = [7, 0], sizes = [1, 8], strides = [1, 1]} : vector<16x8xf32> to vector<1x8xf32>
    %112 = vector.extract_strided_slice %9 {offsets = [0, 7], sizes = [8, 1], strides = [1, 1]} : vector<8x16xf32> to vector<8x1xf32>
    %113 = vector.broadcast %111 : vector<1x8xf32> to vector<8x8xf32>
    %114 = vector.broadcast %112 : vector<8x1xf32> to vector<8x8xf32>
    %115 = arith.addf %113, %114 : vector<8x8xf32>
    %cst_15 = arith.constant 0.000000e+00 : f32
    %116 = vector.broadcast %cst_15 : f32 to vector<8x8xf32>
    %117 = arith.cmpf oge, %115, %116 : vector<8x8xf32>
    %118 = vector.broadcast %109 : f32 to vector<8x8xf32>
    %119 = vector.broadcast %110 : f32 to vector<8x8xf32>
    %120 = arith.select %117, %118, %119 : vector<8x8xi1>, vector<8x8xf32>
    %121 = arith.mulf %120, %115 : vector<8x8xf32>
    %122 = arith.addf %108, %121 : vector<8x8xf32>
    %c0_16 = arith.constant 0 : index
    %c0_17 = arith.constant 0 : index
    %123 = vector.load %arg8[%c0_16, %c0_17] : memref<8x2xf32, #tpu.memory_space<vmem>>, vector<8x1xf32>
    %cst_18 = arith.constant dense<0xFF800000> : vector<8xf32>
    %124 = vector.multi_reduction <maximumf>, %122, %cst_18 [1] : vector<8x8xf32> to vector<8xf32>
    %125 = vector.shape_cast %124 : vector<8xf32> to vector<8x1xf32>
    %126 = arith.maximumf %123, %125 : vector<8x1xf32>
    %127 = arith.subf %123, %126 : vector<8x1xf32>
    %128 = math.exp %127 : vector<8x1xf32>
    %129 = vector.broadcast %126 : vector<8x1xf32> to vector<8x8xf32>
    %130 = arith.subf %122, %129 : vector<8x8xf32>
    %131 = math.exp %130 : vector<8x8xf32>
    %c0_19 = arith.constant 0 : index
    %c0_20 = arith.constant 0 : index
    %132 = vector.load %arg9[%c0_19, %c0_20] : memref<8x2xf32, #tpu.memory_space<vmem>>, vector<8x1xf32>
    %133 = arith.mulf %128, %132 : vector<8x1xf32>
    %cst_21 = arith.constant dense<0.000000e+00> : vector<8xf32>
    %134 = vector.multi_reduction <add>, %131, %cst_21 [1] : vector<8x8xf32> to vector<8xf32>
    %135 = vector.shape_cast %134 : vector<8xf32> to vector<8x1xf32>
    %136 = arith.addf %133, %135 : vector<8x1xf32>
    %c0_22 = arith.constant 0 : index
    %c0_23 = arith.constant 0 : index
    %137 = vector.load %arg9[%c0_22, %c0_23] : memref<8x2xf32, #tpu.memory_space<vmem>>, vector<8x1xf32>
    tpu.vector_store %arg9[%c0_22, %c0_23], %136 {strides = array<i32>} : memref<8x2xf32, #tpu.memory_space<vmem>>, vector<8x1xf32>,
    %c0_24 = arith.constant 0 : index
    %c0_25 = arith.constant 0 : index
    %138 = vector.load %arg10[%c0_24, %c0_25] : memref<8x16xf32, #tpu.memory_space<vmem>>, vector<8x8xf32>
    %139 = vector.broadcast %128 : vector<8x1xf32> to vector<8x8xf32>
    %140 = arith.mulf %139, %138 : vector<8x8xf32>
    %141 = arith.truncf %131 : vector<8x8xf32> to vector<8x8xbf16>
    %c0_26 = arith.constant 0 : index
    %c0_27 = arith.constant 0 : index
    %142 = vector.load %arg4[%c0_26, %c0_27] : memref<8x16xbf16, #tpu.memory_space<vmem>>, vector<8x8xbf16>
    %cst_28 = arith.constant dense<0.000000e+00> : vector<8x8xf32>
    %143 = tpu.matmul %141, %142, %cst_28 {dimension_numbers = #tpu.dot_dimension_numbers<[1], [0], [0], [1], [0, 0, 1, 1], [], []>} : vector<8x8xbf16>, vector<8x8xbf16>, vector<8x8xf32> -> vector<8x8xf32>
    %144 = arith.addf %140, %143 : vector<8x8xf32>
    %c0_29 = arith.constant 0 : index
    %c0_30 = arith.constant 0 : index
    %145 = vector.load %arg10[%c0_29, %c0_30] : memref<8x16xf32, #tpu.memory_space<vmem>>, vector<8x8xf32>
    tpu.vector_store %arg10[%c0_29, %c0_30], %144 {strides = array<i32>} : memref<8x16xf32, #tpu.memory_space<vmem>>, vector<8x8xf32>,
    %c0_31 = arith.constant 0 : index
    %c0_32 = arith.constant 0 : index
    %146 = vector.load %arg8[%c0_31, %c0_32] : memref<8x2xf32, #tpu.memory_space<vmem>>, vector<8x1xf32>
    tpu.vector_store %arg8[%c0_31, %c0_32], %126 {strides = array<i32>} : memref<8x2xf32, #tpu.memory_space<vmem>>, vector<8x1xf32>,
    %c8 = arith.constant 8 : index
    %147 = memref.load %arg2[%c8] : memref<32xf32, #tpu.memory_space<smem>>
    %c24 = arith.constant 24 : index
    %148 = memref.load %arg2[%c24] : memref<32xf32, #tpu.memory_space<smem>>
    %149 = vector.extract_strided_slice %10 {offsets = [8, 0], sizes = [1, 8], strides = [1, 1]} : vector<16x8xf32> to vector<1x8xf32>
    %150 = vector.extract_strided_slice %9 {offsets = [0, 8], sizes = [8, 1], strides = [1, 1]} : vector<8x16xf32> to vector<8x1xf32>
    %151 = vector.broadcast %149 : vector<1x8xf32> to vector<8x8xf32>
    %152 = vector.broadcast %150 : vector<8x1xf32> to vector<8x8xf32>
    %153 = arith.addf %151, %152 : vector<8x8xf32>
    %cst_33 = arith.constant 0.000000e+00 : f32
    %154 = vector.broadcast %cst_33 : f32 to vector<8x8xf32>
    %155 = arith.cmpf oge, %153, %154 : vector<8x8xf32>
    %156 = vector.broadcast %147 : f32 to vector<8x8xf32>
    %157 = vector.broadcast %148 : f32 to vector<8x8xf32>
    %158 = arith.select %155, %156, %157 : vector<8x8xi1>, vector<8x8xf32>
    %159 = arith.mulf %158, %153 : vector<8x8xf32>
    %160 = arith.addf %8, %159 : vector<8x8xf32>
    %c9 = arith.constant 9 : index
    %161 = memref.load %arg2[%c9] : memref<32xf32, #tpu.memory_space<smem>>
    %c25 = arith.constant 25 : index
    %162 = memref.load %arg2[%c25] : memref<32xf32, #tpu.memory_space<smem>>
    %163 = vector.extract_strided_slice %10 {offsets = [9, 0], sizes = [1, 8], strides = [1, 1]} : vector<16x8xf32> to vector<1x8xf32>
    %164 = vector.extract_strided_slice %9 {offsets = [0, 9], sizes = [8, 1], strides = [1, 1]} : vector<8x16xf32> to vector<8x1xf32>
    %165 = vector.broadcast %163 : vector<1x8xf32> to vector<8x8xf32>
    %166 = vector.broadcast %164 : vector<8x1xf32> to vector<8x8xf32>
    %167 = arith.addf %165, %166 : vector<8x8xf32>
    %cst_34 = arith.constant 0.000000e+00 : f32
    %168 = vector.broadcast %cst_34 : f32 to vector<8x8xf32>
    %169 = arith.cmpf oge, %167, %168 : vector<8x8xf32>
    %170 = vector.broadcast %161 : f32 to vector<8x8xf32>
    %171 = vector.broadcast %162 : f32 to vector<8x8xf32>
    %172 = arith.select %169, %170, %171 : vector<8x8xi1>, vector<8x8xf32>
    %173 = arith.mulf %172, %167 : vector<8x8xf32>
    %174 = arith.addf %160, %173 : vector<8x8xf32>
    %c10 = arith.constant 10 : index
    %175 = memref.load %arg2[%c10] : memref<32xf32, #tpu.memory_space<smem>>
    %c26 = arith.constant 26 : index
    %176 = memref.load %arg2[%c26] : memref<32xf32, #tpu.memory_space<smem>>
    %177 = vector.extract_strided_slice %10 {offsets = [10, 0], sizes = [1, 8], strides = [1, 1]} : vector<16x8xf32> to vector<1x8xf32>
    %178 = vector.extract_strided_slice %9 {offsets = [0, 10], sizes = [8, 1], strides = [1, 1]} : vector<8x16xf32> to vector<8x1xf32>
    %179 = vector.broadcast %177 : vector<1x8xf32> to vector<8x8xf32>
    %180 = vector.broadcast %178 : vector<8x1xf32> to vector<8x8xf32>
    %181 = arith.addf %179, %180 : vector<8x8xf32>
    %cst_35 = arith.constant 0.000000e+00 : f32
    %182 = vector.broadcast %cst_35 : f32 to vector<8x8xf32>
    %183 = arith.cmpf oge, %181, %182 : vector<8x8xf32>
    %184 = vector.broadcast %175 : f32 to vector<8x8xf32>
    %185 = vector.broadcast %176 : f32 to vector<8x8xf32>
    %186 = arith.select %183, %184, %185 : vector<8x8xi1>, vector<8x8xf32>
    %187 = arith.mulf %186, %181 : vector<8x8xf32>
    %188 = arith.addf %174, %187 : vector<8x8xf32>
    %c11 = arith.constant 11 : index
    %189 = memref.load %arg2[%c11] : memref<32xf32, #tpu.memory_space<smem>>
    %c27 = arith.constant 27 : index
    %190 = memref.load %arg2[%c27] : memref<32xf32, #tpu.memory_space<smem>>
    %191 = vector.extract_strided_slice %10 {offsets = [11, 0], sizes = [1, 8], strides = [1, 1]} : vector<16x8xf32> to vector<1x8xf32>
    %192 = vector.extract_strided_slice %9 {offsets = [0, 11], sizes = [8, 1], strides = [1, 1]} : vector<8x16xf32> to vector<8x1xf32>
    %193 = vector.broadcast %191 : vector<1x8xf32> to vector<8x8xf32>
    %194 = vector.broadcast %192 : vector<8x1xf32> to vector<8x8xf32>
    %195 = arith.addf %193, %194 : vector<8x8xf32>
    %cst_36 = arith.constant 0.000000e+00 : f32
    %196 = vector.broadcast %cst_36 : f32 to vector<8x8xf32>
    %197 = arith.cmpf oge, %195, %196 : vector<8x8xf32>
    %198 = vector.broadcast %189 : f32 to vector<8x8xf32>
    %199 = vector.broadcast %190 : f32 to vector<8x8xf32>
    %200 = arith.select %197, %198, %199 : vector<8x8xi1>, vector<8x8xf32>
    %201 = arith.mulf %200, %195 : vector<8x8xf32>
    %202 = arith.addf %188, %201 : vector<8x8xf32>
    %c12 = arith.constant 12 : index
    %203 = memref.load %arg2[%c12] : memref<32xf32, #tpu.memory_space<smem>>
    %c28 = arith.constant 28 : index
    %204 = memref.load %arg2[%c28] : memref<32xf32, #tpu.memory_space<smem>>
    %205 = vector.extract_strided_slice %10 {offsets = [12, 0], sizes = [1, 8], strides = [1, 1]} : vector<16x8xf32> to vector<1x8xf32>
    %206 = vector.extract_strided_slice %9 {offsets = [0, 12], sizes = [8, 1], strides = [1, 1]} : vector<8x16xf32> to vector<8x1xf32>
    %207 = vector.broadcast %205 : vector<1x8xf32> to vector<8x8xf32>
    %208 = vector.broadcast %206 : vector<8x1xf32> to vector<8x8xf32>
    %209 = arith.addf %207, %208 : vector<8x8xf32>
    %cst_37 = arith.constant 0.000000e+00 : f32
    %210 = vector.broadcast %cst_37 : f32 to vector<8x8xf32>
    %211 = arith.cmpf oge, %209, %210 : vector<8x8xf32>
    %212 = vector.broadcast %203 : f32 to vector<8x8xf32>
    %213 = vector.broadcast %204 : f32 to vector<8x8xf32>
    %214 = arith.select %211, %212, %213 : vector<8x8xi1>, vector<8x8xf32>
    %215 = arith.mulf %214, %209 : vector<8x8xf32>
    %216 = arith.addf %202, %215 : vector<8x8xf32>
    %c13 = arith.constant 13 : index
    %217 = memref.load %arg2[%c13] : memref<32xf32, #tpu.memory_space<smem>>
    %c29 = arith.constant 29 : index
    %218 = memref.load %arg2[%c29] : memref<32xf32, #tpu.memory_space<smem>>
    %219 = vector.extract_strided_slice %10 {offsets = [13, 0], sizes = [1, 8], strides = [1, 1]} : vector<16x8xf32> to vector<1x8xf32>
    %220 = vector.extract_strided_slice %9 {offsets = [0, 13], sizes = [8, 1], strides = [1, 1]} : vector<8x16xf32> to vector<8x1xf32>
    %221 = vector.broadcast %219 : vector<1x8xf32> to vector<8x8xf32>
    %222 = vector.broadcast %220 : vector<8x1xf32> to vector<8x8xf32>
    %223 = arith.addf %221, %222 : vector<8x8xf32>
    %cst_38 = arith.constant 0.000000e+00 : f32
    %224 = vector.broadcast %cst_38 : f32 to vector<8x8xf32>
    %225 = arith.cmpf oge, %223, %224 : vector<8x8xf32>
    %226 = vector.broadcast %217 : f32 to vector<8x8xf32>
    %227 = vector.broadcast %218 : f32 to vector<8x8xf32>
    %228 = arith.select %225, %226, %227 : vector<8x8xi1>, vector<8x8xf32>
    %229 = arith.mulf %228, %223 : vector<8x8xf32>
    %230 = arith.addf %216, %229 : vector<8x8xf32>
    %c14 = arith.constant 14 : index
    %231 = memref.load %arg2[%c14] : memref<32xf32, #tpu.memory_space<smem>>
    %c30 = arith.constant 30 : index
    %232 = memref.load %arg2[%c30] : memref<32xf32, #tpu.memory_space<smem>>
    %233 = vector.extract_strided_slice %10 {offsets = [14, 0], sizes = [1, 8], strides = [1, 1]} : vector<16x8xf32> to vector<1x8xf32>
    %234 = vector.extract_strided_slice %9 {offsets = [0, 14], sizes = [8, 1], strides = [1, 1]} : vector<8x16xf32> to vector<8x1xf32>
    %235 = vector.broadcast %233 : vector<1x8xf32> to vector<8x8xf32>
    %236 = vector.broadcast %234 : vector<8x1xf32> to vector<8x8xf32>
    %237 = arith.addf %235, %236 : vector<8x8xf32>
    %cst_39 = arith.constant 0.000000e+00 : f32
    %238 = vector.broadcast %cst_39 : f32 to vector<8x8xf32>
    %239 = arith.cmpf oge, %237, %238 : vector<8x8xf32>
    %240 = vector.broadcast %231 : f32 to vector<8x8xf32>
    %241 = vector.broadcast %232 : f32 to vector<8x8xf32>
    %242 = arith.select %239, %240, %241 : vector<8x8xi1>, vector<8x8xf32>
    %243 = arith.mulf %242, %237 : vector<8x8xf32>
    %244 = arith.addf %230, %243 : vector<8x8xf32>
    %c15 = arith.constant 15 : index
    %245 = memref.load %arg2[%c15] : memref<32xf32, #tpu.memory_space<smem>>
    %c31 = arith.constant 31 : index
    %246 = memref.load %arg2[%c31] : memref<32xf32, #tpu.memory_space<smem>>
    %247 = vector.extract_strided_slice %10 {offsets = [15, 0], sizes = [1, 8], strides = [1, 1]} : vector<16x8xf32> to vector<1x8xf32>
    %248 = vector.extract_strided_slice %9 {offsets = [0, 15], sizes = [8, 1], strides = [1, 1]} : vector<8x16xf32> to vector<8x1xf32>
    %249 = vector.broadcast %247 : vector<1x8xf32> to vector<8x8xf32>
    %250 = vector.broadcast %248 : vector<8x1xf32> to vector<8x8xf32>
    %251 = arith.addf %249, %250 : vector<8x8xf32>
    %cst_40 = arith.constant 0.000000e+00 : f32
    %252 = vector.broadcast %cst_40 : f32 to vector<8x8xf32>
    %253 = arith.cmpf oge, %251, %252 : vector<8x8xf32>
    %254 = vector.broadcast %245 : f32 to vector<8x8xf32>
    %255 = vector.broadcast %246 : f32 to vector<8x8xf32>
    %256 = arith.select %253, %254, %255 : vector<8x8xi1>, vector<8x8xf32>
    %257 = arith.mulf %256, %251 : vector<8x8xf32>
    %258 = arith.addf %244, %257 : vector<8x8xf32>
    %c0_41 = arith.constant 0 : index
    %c1_42 = arith.constant 1 : index
    %259 = vector.load %arg8[%c0_41, %c1_42] : memref<8x2xf32, #tpu.memory_space<vmem>>, vector<8x1xf32>
    %cst_43 = arith.constant dense<0xFF800000> : vector<8xf32>
    %260 = vector.multi_reduction <maximumf>, %258, %cst_43 [1] : vector<8x8xf32> to vector<8xf32>
    %261 = vector.shape_cast %260 : vector<8xf32> to vector<8x1xf32>
    %262 = arith.maximumf %259, %261 : vector<8x1xf32>
    %263 = arith.subf %259, %262 : vector<8x1xf32>
    %264 = math.exp %263 : vector<8x1xf32>
    %265 = vector.broadcast %262 : vector<8x1xf32> to vector<8x8xf32>
    %266 = arith.subf %258, %265 : vector<8x8xf32>
    %267 = math.exp %266 : vector<8x8xf32>
    %c0_44 = arith.constant 0 : index
    %c1_45 = arith.constant 1 : index
    %268 = vector.load %arg9[%c0_44, %c1_45] : memref<8x2xf32, #tpu.memory_space<vmem>>, vector<8x1xf32>
    %269 = arith.mulf %264, %268 : vector<8x1xf32>
    %cst_46 = arith.constant dense<0.000000e+00> : vector<8xf32>
    %270 = vector.multi_reduction <add>, %267, %cst_46 [1] : vector<8x8xf32> to vector<8xf32>
    %271 = vector.shape_cast %270 : vector<8xf32> to vector<8x1xf32>
    %272 = arith.addf %269, %271 : vector<8x1xf32>
    %c0_47 = arith.constant 0 : index
    %c1_48 = arith.constant 1 : index
    %273 = vector.load %arg9[%c0_47, %c1_48] : memref<8x2xf32, #tpu.memory_space<vmem>>, vector<8x1xf32>
    tpu.vector_store %arg9[%c0_47, %c1_48], %272 {strides = array<i32>} : memref<8x2xf32, #tpu.memory_space<vmem>>, vector<8x1xf32>,
    %c0_49 = arith.constant 0 : index
    %c8_50 = arith.constant 8 : index
    %274 = vector.load %arg10[%c0_49, %c8_50] : memref<8x16xf32, #tpu.memory_space<vmem>>, vector<8x8xf32>
    %275 = vector.broadcast %264 : vector<8x1xf32> to vector<8x8xf32>
    %276 = arith.mulf %275, %274 : vector<8x8xf32>
    %277 = arith.truncf %267 : vector<8x8xf32> to vector<8x8xbf16>
    %c0_51 = arith.constant 0 : index
    %c8_52 = arith.constant 8 : index
    %278 = vector.load %arg4[%c0_51, %c8_52] : memref<8x16xbf16, #tpu.memory_space<vmem>>, vector<8x8xbf16>
    %cst_53 = arith.constant dense<0.000000e+00> : vector<8x8xf32>
    %279 = tpu.matmul %277, %278, %cst_53 {dimension_numbers = #tpu.dot_dimension_numbers<[1], [0], [0], [1], [0, 0, 1, 1], [], []>} : vector<8x8xbf16>, vector<8x8xbf16>, vector<8x8xf32> -> vector<8x8xf32>
    %280 = arith.addf %276, %279 : vector<8x8xf32>
    %c0_54 = arith.constant 0 : index
    %c8_55 = arith.constant 8 : index
    %281 = vector.load %arg10[%c0_54, %c8_55] : memref<8x16xf32, #tpu.memory_space<vmem>>, vector<8x8xf32>
    tpu.vector_store %arg10[%c0_54, %c8_55], %280 {strides = array<i32>} : memref<8x16xf32, #tpu.memory_space<vmem>>, vector<8x8xf32>,
    %c0_56 = arith.constant 0 : index
    %c1_57 = arith.constant 1 : index
    %282 = vector.load %arg8[%c0_56, %c1_57] : memref<8x2xf32, #tpu.memory_space<vmem>>, vector<8x1xf32>
    tpu.vector_store %arg8[%c0_56, %c1_57], %262 {strides = array<i32>} : memref<8x2xf32, #tpu.memory_space<vmem>>, vector<8x1xf32>,
    %c0_i32_58 = arith.constant 0 : i32
    %283 = arith.cmpi eq, %arg1, %c0_i32_58 : i32
    %284 = arith.extui %283 : i1 to i32
    %c0_i32_59 = arith.constant 0 : i32
    %285 = arith.cmpi ne, %284, %c0_i32_59 : i32
    scf.if %285 {
      %c0_60 = arith.constant 0 : index
      %c0_61 = arith.constant 0 : index
      %286 = vector.load %arg9[%c0_60, %c0_61] : memref<8x2xf32, #tpu.memory_space<vmem>>, vector<8x2xf32>
      %cst_62 = arith.constant 1.000000e+00 : f32
      %287 = vector.broadcast %cst_62 : f32 to vector<8x2xf32>
      %288 = arith.divf %287, %286 : vector<8x2xf32>
      %c0_63 = arith.constant 0 : index
      %c0_64 = arith.constant 0 : index
      %289 = vector.load %arg10[%c0_63, %c0_64] : memref<8x16xf32, #tpu.memory_space<vmem>>, vector<8x8xf32>
      %290 = vector.extract_strided_slice %288 {offsets = [0, 0], sizes = [8, 1], strides = [1, 1]} : vector<8x2xf32> to vector<8x1xf32>
      %291 = vector.broadcast %290 : vector<8x1xf32> to vector<8x8xf32>
      %292 = arith.mulf %289, %291 : vector<8x8xf32>
      %c0_65 = arith.constant 0 : index
      %c8_66 = arith.constant 8 : index
      %293 = vector.load %arg10[%c0_65, %c8_66] : memref<8x16xf32, #tpu.memory_space<vmem>>, vector<8x8xf32>
      %294 = vector.extract_strided_slice %288 {offsets = [0, 1], sizes = [8, 1], strides = [1, 1]} : vector<8x2xf32> to vector<8x1xf32>
      %295 = vector.broadcast %294 : vector<8x1xf32> to vector<8x8xf32>
      %296 = arith.mulf %293, %295 : vector<8x8xf32>
      %c0_67 = arith.constant 0 : index
      %c0_68 = arith.constant 0 : index
      %297 = vector.load %arg8[%c0_67, %c0_68] : memref<8x2xf32, #tpu.memory_space<vmem>>, vector<8x2xf32>
      %c0_69 = arith.constant 0 : index
      %c0_70 = arith.constant 0 : index
      %298 = vector.load %arg9[%c0_69, %c0_70] : memref<8x2xf32, #tpu.memory_space<vmem>>, vector<8x2xf32>
      %cst_71 = arith.constant 0.000000e+00 : f32
      %299 = vector.broadcast %cst_71 : f32 to vector<8x108xf32>
      %300 = tpu.concatenate %292, %296, %297, %298, %299 in 1 : vector<8x8xf32>, vector<8x8xf32>, vector<8x2xf32>, vector<8x2xf32>, vector<8x108xf32> -> vector<8x128xf32>
      %c0_72 = arith.constant 0 : index
      %c0_73 = arith.constant 0 : index
      %301 = vector.load %arg7[%c0_72, %c0_73] : memref<8x128xf32, #tpu.memory_space<vmem>>, vector<8x128xf32>
      tpu.vector_store %arg7[%c0_72, %c0_73], %300 {strides = array<i32>} : memref<8x128xf32, #tpu.memory_space<vmem>>, vector<8x128xf32>,
    } else {
    }
    return
  }
  func.func @transform_0(%arg0: i32, %arg1: i32) -> i32 {
    %c0_i32 = arith.constant 0 : i32
    %c0_i32_0 = arith.constant 0 : i32
    return %c0_i32 : i32
  }
  func.func @transform_1(%arg0: i32, %arg1: i32) -> (i32, i32) {
    %c0_i32 = arith.constant 0 : i32
    %c0_i32_0 = arith.constant 0 : i32
    return %c0_i32, %arg1 : i32, i32
  }
  func.func @transform_2(%arg0: i32, %arg1: i32) -> (i32, i32) {
    %c0_i32 = arith.constant 0 : i32
    %c0_i32_0 = arith.constant 0 : i32
    return %arg1, %c0_i32 : i32, i32
  }
  func.func @transform_3(%arg0: i32, %arg1: i32) -> (i32, i32) {
    %c0_i32 = arith.constant 0 : i32
    %c0_i32_0 = arith.constant 0 : i32
    return %arg0, %c0_i32 : i32, i32
  }
  func.func @transform_4(%arg0: i32, %arg1: i32) -> (i32, i32) {
    %c0_i32 = arith.constant 0 : i32
    return %arg0, %arg1 : i32, i32
  }
  func.func @transform_5(%arg0: i32, %arg1: i32) -> (i32, i32) {
    %c0_i32 = arith.constant 0 : i32
    %c0_i32_0 = arith.constant 0 : i32
    return %arg0, %c0_i32 : i32, i32
  }
}

</mosaic_0001>

<llo_original>
// kernel: tpu_custom_call.1
$region0: #{tpu_custom_call.1}
  #allocation0 [shape = 'u32[]', space=smem, size = 0x4, offset = 0x4, fixed_abs, tag = 'smem constant byte address 0x4 - core index']
  #allocation1 [shape = 'u32[144,128]{1,0:T(1,128)}', space=vmem, size = 0x12000, scoped, tag = 'internal scratch']
  #allocation2 [shape = 'f32[8,2]{1,0:T(8,128)}', space=vmem, size = 0x1000, scoped, tag = 'scratch operand']
  #allocation3 [shape = 'f32[8,2]{1,0:T(8,128)}', space=vmem, size = 0x1000, scoped, tag = 'scratch operand']
  #allocation4 [shape = 'f32[8,16]{1,0:T(8,128)}', space=vmem, size = 0x1000, scoped, tag = 'scratch operand']
  %s0 = inlined_call_operand.vmem [shape: f32[32], index: 0, kind: input, shape index: {}]
  %s1 = inlined_call_operand.vmem [shape: f32[16,8], index: 1, kind: input, shape index: {}]
  %s2 = inlined_call_operand.vmem [shape: bf16[8,16], index: 2, kind: input, shape index: {}]
  %s3 = inlined_call_operand.vmem [shape: f32[8,16], index: 3, kind: input, shape index: {}]
  %s4 = inlined_call_operand.vmem [shape: s8[8,8], index: 4, kind: input, shape index: {}]
  %s5 = inlined_call_operand.hbm [shape: f32[8,128], index: 5, kind: output, shape index: {}]
  %s6 = sld [smem:[#allocation0]]
  $region42: #{tpu_custom_call.1} parent=0
    _
  %s8 = ssub.s32 1, %s6
  %s9 = scalar_select 0, %s8, %s6
  $region1: #{tpu_custom_call.1} parent=0
    #allocation5 [shape = 'u8[512]{0}', space=smem, size = 0x200, scoped, tag = 'input window, operand 0, single buffered']
    #allocation6 [shape = 's32[1]{0}', space=sflag, size = 0x4, scoped, tag = 'scoped memory for tpu_custom_call.1']
    #allocation7 [shape = 's32[1]{0}', space=sflag, size = 0x4, scoped, tag = 'scoped memory for tpu_custom_call.1']
    #allocation8 [shape = 'u8[4096]{0}', space=vmem, size = 0x1000, scoped, tag = 'output window, operand 0, single buffered']
    %10 = vsyncpa [#allocation7], 0
    %11 = vsyncpa [#allocation6], 0
    // Predicated region
    $region2: #{tpu_custom_call.1} parent=1 // pred_check
      _
    $region3: #{tpu_custom_call.1} parent=1 // pred_check_branch
      %13 = sbr.rel (0) target = $region5
    $region4: #{tpu_custom_call.1} parent=1 // pred_region
      %s15 = ssub.s32 16, 16
      %16 = vsyncadd [#allocation7], %s15
      %s18 = sshll.u32 %s0, 4
      %s19 = int_to_ptr.vmem [resolvable:$true] %s18
      %21 = dma.vmem_to_smem %s19, 16, [#allocation5], [#allocation7]
    $region5: #{tpu_custom_call.1} parent=1 // pred_fallthru
      _
    // Predicated region
    $region6: #{tpu_custom_call.1} parent=1 // pred_check
      _
    $region7: #{tpu_custom_call.1} parent=1 // pred_check_branch
      %23 = sbr.rel (0) target = $region9
    $region8: #{tpu_custom_call.1} parent=1 // pred_region
      _
    $region9: #{tpu_custom_call.1} parent=1 // pred_fallthru
      _
    // Predicated region
    $region10: #{tpu_custom_call.1} parent=1 // pred_check
      _
    $region11: #{tpu_custom_call.1} parent=1 // pred_check_branch
      %25 = sbr.rel (0) target = $region13
    $region12: #{tpu_custom_call.1} parent=1 // pred_region
      _
    $region13: #{tpu_custom_call.1} parent=1 // pred_fallthru
      _
    // Predicated region
    $region14: #{tpu_custom_call.1} parent=1 // pred_check
      _
    $region15: #{tpu_custom_call.1} parent=1 // pred_check_branch
      %27 = sbr.rel (0) target = $region17
    $region16: #{tpu_custom_call.1} parent=1 // pred_region
      _
    $region17: #{tpu_custom_call.1} parent=1 // pred_fallthru
      _
    // Predicated region
    $region18: #{tpu_custom_call.1} parent=1 // pred_check
      _
    $region19: #{tpu_custom_call.1} parent=1 // pred_check_branch
      %29 = sbr.rel (0) target = $region21
    $region20: #{tpu_custom_call.1} parent=1 // pred_region
      _
    $region21: #{tpu_custom_call.1} parent=1 // pred_fallthru
      _
    // Predicated region
    $region22: #{tpu_custom_call.1} parent=1 // pred_check
      _
    $region23: #{tpu_custom_call.1} parent=1 // pred_check_branch
      %31 = sbr.rel (0) target = $region25
    $region24: #{tpu_custom_call.1} parent=1 // pred_region
      %32 = dma.done [#allocation7], 16
    $region25: #{tpu_custom_call.1} parent=1 // pred_fallthru
      _
    %33 = sfence
    %p35 = scmp.eq.s32.totalorder 0, 0
    // Predicated region
    $region26: #{tpu_custom_call.1} parent=1 // pred_check
      %p36 = pneg %p35
    $region27: #{tpu_custom_call.1} parent=1 // pred_check_branch
      %38 = sbr.rel (%p36) target = $region29
    $region28: #{tpu_custom_call.1} parent=1 // pred_region
      %vm39 = vcmask 15360
      %40 = vst.msk [vmem:[#allocation2] sm:$0xff] %vm39, -inf
      %41 = vst.msk [vmem:[#allocation3] sm:$0xff] %vm39, 0.0
      %vm42 = vcmask 130048
      %43 = vst.msk [vmem:[#allocation4] sm:$0xff] %vm42, 0.0
    $region29: #{tpu_custom_call.1} parent=1 // pred_fallthru
      _
    %v44 = vld [vmem:[%s4] sm:$0x3]
    %v45 = vunpack.c.0.s8 %v44
    %v46 = vcvt.s32.f32 %v45
    %v47 = vsub.f32 %v46, 1.0
    %v48 = vmul.f32 %v47, 1e+30
    %v49 = vld [vmem:[%s3] sm:$0xff]
    %v50 = vld [vmem:[%s1] sm:$0xff]
    %v51 = vld [vmem:[%s1 + $0x8] sm:$0xff]
    %s52 = sld [smem:[#allocation5]]
    %s53 = sld [smem:[#allocation5 + $0x10]]
    %v54 = vlaneseq
    %v55 = vshrl.u32 %v54, 7
    %v56 = vsub.s32 0, %v55
    %v57 = vrot.slane %v50, %v56
    %59 = vset.pattern.permute.xlu0 0
    %60 = vperm.xlu0 %59, %v49
    %v61 = vpop.permute.xlu0 %60
    %v63 = vadd.f32 %v57, %v61
    %vm64 = vcmp.ge.f32.partialorder %v63, 0.0
    %v65 = vstv %s52
    %v66 = vstv %s53
    %v67 = vsel %vm64, %v65, %v66
    %v68 = vmul.f32 %v67, %v63
    %v69 = vadd.f32 %v48, %v68
    %s70 = sld [smem:[#allocation5 + $0x1]]
    %s71 = sld [smem:[#allocation5 + $0x11]]
    %v72 = vlaneseq
    %v73 = vshrl.u32 %v72, 7
    %v74 = vsub.s32 1, %v73
    %v75 = vrot.slane %v50, %v74
    %76 = vset.pattern.permute.xlu0 1
    %77 = vperm.xlu0 %76, %v49
    %v78 = vpop.permute.xlu0 %77
    %v80 = vadd.f32 %v75, %v78
    %vm81 = vcmp.ge.f32.partialorder %v80, 0.0
    %v82 = vstv %s70
    %v83 = vstv %s71
    %v84 = vsel %vm81, %v82, %v83
    %v85 = vmul.f32 %v84, %v80
    %v86 = vadd.f32 %v69, %v85
    %s87 = sld [smem:[#allocation5 + $0x2]]
    %s88 = sld [smem:[#allocation5 + $0x12]]
    %v89 = vlaneseq
    %v90 = vshrl.u32 %v89, 7
    %v91 = vsub.s32 2, %v90
    %v92 = vrot.slane %v50, %v91
    %93 = vset.pattern.permute.xlu0 2
    %94 = vperm.xlu0 %93, %v49
    %v95 = vpop.permute.xlu0 %94
    %v97 = vadd.f32 %v92, %v95
    %vm98 = vcmp.ge.f32.partialorder %v97, 0.0
    %v99 = vstv %s87
    %v100 = vstv %s88
    %v101 = vsel %vm98, %v99, %v100
    %v102 = vmul.f32 %v101, %v97
    %v103 = vadd.f32 %v86, %v102
    %s104 = sld [smem:[#allocation5 + $0x3]]
    %s105 = sld [smem:[#allocation5 + $0x13]]
    %v106 = vlaneseq
    %v107 = vshrl.u32 %v106, 7
    %v108 = vsub.s32 3, %v107
    %v109 = vrot.slane %v50, %v108
    %110 = vset.pattern.permute.xlu0 3
    %111 = vperm.xlu0 %110, %v49
    %v112 = vpop.permute.xlu0 %111
    %v114 = vadd.f32 %v109, %v112
    %vm115 = vcmp.ge.f32.partialorder %v114, 0.0
    %v116 = vstv %s104
    %v117 = vstv %s105
    %v118 = vsel %vm115, %v116, %v117
    %v119 = vmul.f32 %v118, %v114
    %v120 = vadd.f32 %v103, %v119
    %s121 = sld [smem:[#allocation5 + $0x4]]
    %s122 = sld [smem:[#allocation5 + $0x14]]
    %v123 = vlaneseq
    %v124 = vshrl.u32 %v123, 7
    %v125 = vsub.s32 4, %v124
    %v126 = vrot.slane %v50, %v125
    %127 = vset.pattern.permute.xlu0 4
    %128 = vperm.xlu0 %127, %v49
    %v129 = vpop.permute.xlu0 %128
    %v131 = vadd.f32 %v126, %v129
    %vm132 = vcmp.ge.f32.partialorder %v131, 0.0
    %v133 = vstv %s121
    %v134 = vstv %s122
    %v135 = vsel %vm132, %v133, %v134
    %v136 = vmul.f32 %v135, %v131
    %v137 = vadd.f32 %v120, %v136
    %s138 = sld [smem:[#allocation5 + $0x5]]
    %s139 = sld [smem:[#allocation5 + $0x15]]
    %v140 = vlaneseq
    %v141 = vshrl.u32 %v140, 7
    %v142 = vsub.s32 5, %v141
    %v143 = vrot.slane %v50, %v142
    %144 = vset.pattern.permute.xlu0 5
    %145 = vperm.xlu0 %144, %v49
    %v146 = vpop.permute.xlu0 %145
    %v148 = vadd.f32 %v143, %v146
    %vm149 = vcmp.ge.f32.partialorder %v148, 0.0
    %v150 = vstv %s138
    %v151 = vstv %s139
    %v152 = vsel %vm149, %v150, %v151
    %v153 = vmul.f32 %v152, %v148
    %v154 = vadd.f32 %v137, %v153
    %s155 = sld [smem:[#allocation5 + $0x6]]
    %s156 = sld [smem:[#allocation5 + $0x16]]
    %v157 = vlaneseq
    %v158 = vshrl.u32 %v157, 7
    %v159 = vsub.s32 6, %v158
    %v160 = vrot.slane %v50, %v159
    %161 = vset.pattern.permute.xlu0 6
    %162 = vperm.xlu0 %161, %v49
    %v163 = vpop.permute.xlu0 %162
    %v165 = vadd.f32 %v160, %v163
    %vm166 = vcmp.ge.f32.partialorder %v165, 0.0
    %v167 = vstv %s155
    %v168 = vstv %s156
    %v169 = vsel %vm166, %v167, %v168
    %v170 = vmul.f32 %v169, %v165
    %v171 = vadd.f32 %v154, %v170
    %s172 = sld [smem:[#allocation5 + $0x7]]
    %s173 = sld [smem:[#allocation5 + $0x17]]
    %v174 = vlaneseq
    %v175 = vshrl.u32 %v174, 7
    %v176 = vsub.s32 7, %v175
    %v177 = vrot.slane %v50, %v176
    %178 = vset.pattern.permute.xlu0 7
    %179 = vperm.xlu0 %178, %v49
    %v180 = vpop.permute.xlu0 %179
    %v182 = vadd.f32 %v177, %v180
    %vm183 = vcmp.ge.f32.partialorder %v182, 0.0
    %v184 = vstv %s172
    %v185 = vstv %s173
    %v186 = vsel %vm183, %v184, %v185
    %v187 = vmul.f32 %v186, %v182
    %v188 = vadd.f32 %v171, %v187
    %v189 = vld [vmem:[#allocation2] sm:$0xff]
    %vm190 = vcmask 64512
    %v191 = vsel %vm190, %v188, -inf
    %192 = vmax.xlane.f32.xlu0 %v191
    %v193 = vpop.xlane.xlu0 %192
    %v194 = vmax.f32 %v189, %v193
    %v195 = vsub.f32 %v189, %v194
    %v196 = vmul.f32 %v195, 1.442695
    %v197 = vpow.pop %v196
    %199 = vset.pattern.permute.xlu0 0
    %200 = vperm.xlu0 %199, %v194
    %v201 = vpop.permute.xlu0 %200
    %v203 = vsub.f32 %v188, %v201
    %v204 = vmul.f32 %v203, 1.442695
    %v205 = vpow.pop %v204
    %v206 = vld [vmem:[#allocation3] sm:$0xff]
    %v207 = vmul.f32 %v197, %v206
    %v208 = vsel %vm190, %v205, 0.0
    %209 = vadd.xlane.f32.xlu0 %v208
    %v210 = vpop.xlane.xlu0 %209
    %v211 = vadd.f32 %v207, %v210
    %vm212 = vcmask 7168
    %213 = vst.msk [vmem:[#allocation3] sm:$0xff] %vm212, %v211
    %v214 = vld [vmem:[#allocation4] sm:$0xff]
    %216 = vset.pattern.permute.xlu0 0
    %217 = vperm.xlu0 %216, %v197
    %v218 = vpop.permute.xlu0 %217
    %v220 = vmul.f32 %v218, %v214
    %v221 = vpack.c.bf16 %v205, %v205
    %v222 = vld [vmem:[%s2] sm:$0xf]
    %v224 = vsel %vm190, %v221, 0
    %vm226 = vcmask 1043456
    %v228 = vsel %vm226, %v222, 0
    %230 = vmatprep.subr.bf16.mxu0 0
    %231 = vmatpush1.bf16.msra.mxu0 0
    %232 = vmatprep.subr.bf16.mxu0 0
    %233 = vmatpush1.bf16.msra.mxu0 0
    %234 = vmatprep.subr.bf16.mxu0 0
    %235 = vmatpush1.bf16.msra.mxu0 0
    %236 = vmatprep.subr.bf16.mxu0 0
    %237 = vmatpush1.bf16.msra.mxu0 0
    %238 = vmatprep.subr.bf16.mxu0 0
    %239 = vmatpush1.bf16.msra.mxu0 0
    %240 = vmatprep.subr.bf16.mxu0 0
    %241 = vmatpush1.bf16.msra.mxu0 0
    %242 = vmatprep.subr.bf16.mxu0 0
    %243 = vmatpush1.bf16.msra.mxu0 0
    %244 = vmatprep.subr.bf16.mxu0 0
    %245 = vmatpush1.bf16.msra.mxu0 %v228
    %246 = vmatprep.subr.bf16.mxu0 0
    %247 = vmatpush2.bf16.msra.mxu0 0
    %248 = vmatprep.subr.bf16.mxu0 0
    %249 = vmatpush2.bf16.msra.mxu0 0
    %250 = vmatprep.subr.bf16.mxu0 0
    %251 = vmatpush2.bf16.msra.mxu0 0
    %252 = vmatprep.subr.bf16.mxu0 0
    %253 = vmatpush2.bf16.msra.mxu0 0
    %254 = vmatprep.subr.bf16.mxu0 0
    %255 = vmatpush2.bf16.msra.mxu0 0
    %256 = vmatprep.subr.bf16.mxu0 0
    %257 = vmatpush2.bf16.msra.mxu0 0
    %258 = vmatprep.subr.bf16.mxu0 0
    %259 = vmatpush2.bf16.msra.mxu0 0
    %260 = vmatprep.subr.bf16.mxu0 0
    %261 = vmatpush2.bf16.msra.mxu0 0
    %262 = vmatprep.mubr.bf16.mxu0 0
    %263 = vmatmul.mubr.bf16.gmra.mxu0 %v224
    %v264 = vpop.f32.mrf.mxu0
    %v265 = vadd.f32 0.0, %v264
    %v266 = vpop.f32.mrf.mxu0
    %v267 = vpop.f32.mrf.mxu0
    %v268 = vpop.f32.mrf.mxu0
    %269 = vdwg.mxu0
    %v270 = vadd.f32 %v220, %v265
    %271 = vst.msk [vmem:[#allocation4] sm:$0xff] %vm190, %v270
    %272 = vst.msk [vmem:[#allocation2] sm:$0xff] %vm212, %v194
    %s273 = sld [smem:[#allocation5 + $0x8]]
    %s274 = sld [smem:[#allocation5 + $0x18]]
    %v275 = vlaneseq
    %v276 = vshrl.u32 %v275, 7
    %v277 = vsub.s32 0, %v276
    %v278 = vrot.slane %v51, %v277
    %279 = vset.pattern.permute.xlu0 8
    %280 = vperm.xlu0 %279, %v49
    %v281 = vpop.permute.xlu0 %280
    %v283 = vadd.f32 %v278, %v281
    %vm284 = vcmp.ge.f32.partialorder %v283, 0.0
    %v285 = vstv %s273
    %v286 = vstv %s274
    %v287 = vsel %vm284, %v285, %v286
    %v288 = vmul.f32 %v287, %v283
    %v289 = vadd.f32 %v48, %v288
    %s290 = sld [smem:[#allocation5 + $0x9]]
    %s291 = sld [smem:[#allocation5 + $0x19]]
    %v292 = vlaneseq
    %v293 = vshrl.u32 %v292, 7
    %v294 = vsub.s32 1, %v293
    %v295 = vrot.slane %v51, %v294
    %296 = vset.pattern.permute.xlu0 9
    %297 = vperm.xlu0 %296, %v49
    %v298 = vpop.permute.xlu0 %297
    %v300 = vadd.f32 %v295, %v298
    %vm301 = vcmp.ge.f32.partialorder %v300, 0.0
    %v302 = vstv %s290
    %v303 = vstv %s291
    %v304 = vsel %vm301, %v302, %v303
    %v305 = vmul.f32 %v304, %v300
    %v306 = vadd.f32 %v289, %v305
    %s307 = sld [smem:[#allocation5 + $0xa]]
    %s308 = sld [smem:[#allocation5 + $0x1a]]
    %v309 = vlaneseq
    %v310 = vshrl.u32 %v309, 7
    %v311 = vsub.s32 2, %v310
    %v312 = vrot.slane %v51, %v311
    %313 = vset.pattern.permute.xlu0 10
    %314 = vperm.xlu0 %313, %v49
    %v315 = vpop.permute.xlu0 %314
    %v317 = vadd.f32 %v312, %v315
    %vm318 = vcmp.ge.f32.partialorder %v317, 0.0
    %v319 = vstv %s307
    %v320 = vstv %s308
    %v321 = vsel %vm318, %v319, %v320
    %v322 = vmul.f32 %v321, %v317
    %v323 = vadd.f32 %v306, %v322
    %s324 = sld [smem:[#allocation5 + $0xb]]
    %s325 = sld [smem:[#allocation5 + $0x1b]]
    %v326 = vlaneseq
    %v327 = vshrl.u32 %v326, 7
    %v328 = vsub.s32 3, %v327
    %v329 = vrot.slane %v51, %v328
    %330 = vset.pattern.permute.xlu0 11
    %331 = vperm.xlu0 %330, %v49
    %v332 = vpop.permute.xlu0 %331
    %v334 = vadd.f32 %v329, %v332
    %vm335 = vcmp.ge.f32.partialorder %v334, 0.0
    %v336 = vstv %s324
    %v337 = vstv %s325
    %v338 = vsel %vm335, %v336, %v337
    %v339 = vmul.f32 %v338, %v334
    %v340 = vadd.f32 %v323, %v339
    %s341 = sld [smem:[#allocation5 + $0xc]]
    %s342 = sld [smem:[#allocation5 + $0x1c]]
    %v343 = vlaneseq
    %v344 = vshrl.u32 %v343, 7
    %v345 = vsub.s32 4, %v344
    %v346 = vrot.slane %v51, %v345
    %347 = vset.pattern.permute.xlu0 12
    %348 = vperm.xlu0 %347, %v49
    %v349 = vpop.permute.xlu0 %348
    %v351 = vadd.f32 %v346, %v349
    %vm352 = vcmp.ge.f32.partialorder %v351, 0.0
    %v353 = vstv %s341
    %v354 = vstv %s342
    %v355 = vsel %vm352, %v353, %v354
    %v356 = vmul.f32 %v355, %v351
    %v357 = vadd.f32 %v340, %v356
    %s358 = sld [smem:[#allocation5 + $0xd]]
    %s359 = sld [smem:[#allocation5 + $0x1d]]
    %v360 = vlaneseq
    %v361 = vshrl.u32 %v360, 7
    %v362 = vsub.s32 5, %v361
    %v363 = vrot.slane %v51, %v362
    %364 = vset.pattern.permute.xlu0 13
    %365 = vperm.xlu0 %364, %v49
    %v366 = vpop.permute.xlu0 %365
    %v368 = vadd.f32 %v363, %v366
    %vm369 = vcmp.ge.f32.partialorder %v368, 0.0
    %v370 = vstv %s358
    %v371 = vstv %s359
    %v372 = vsel %vm369, %v370, %v371
    %v373 = vmul.f32 %v372, %v368
    %v374 = vadd.f32 %v357, %v373
    %s375 = sld [smem:[#allocation5 + $0xe]]
    %s376 = sld [smem:[#allocation5 + $0x1e]]
    %v377 = vlaneseq
    %v378 = vshrl.u32 %v377, 7
    %v379 = vsub.s32 6, %v378
    %v380 = vrot.slane %v51, %v379
    %381 = vset.pattern.permute.xlu0 14
    %382 = vperm.xlu0 %381, %v49
    %v383 = vpop.permute.xlu0 %382
    %v385 = vadd.f32 %v380, %v383
    %vm386 = vcmp.ge.f32.partialorder %v385, 0.0
    %v387 = vstv %s375
    %v388 = vstv %s376
    %v389 = vsel %vm386, %v387, %v388
    %v390 = vmul.f32 %v389, %v385
    %v391 = vadd.f32 %v374, %v390
    %s392 = sld [smem:[#allocation5 + $0xf]]
    %s393 = sld [smem:[#allocation5 + $0x1f]]
    %v394 = vlaneseq
    %v395 = vshrl.u32 %v394, 7
    %v396 = vsub.s32 7, %v395
    %v397 = vrot.slane %v51, %v396
    %398 = vset.pattern.permute.xlu0 15
    %399 = vperm.xlu0 %398, %v49
    %v400 = vpop.permute.xlu0 %399
    %v402 = vadd.f32 %v397, %v400
    %vm403 = vcmp.ge.f32.partialorder %v402, 0.0
    %v404 = vstv %s392
    %v405 = vstv %s393
    %v406 = vsel %vm403, %v404, %v405
    %v407 = vmul.f32 %v406, %v402
    %v408 = vadd.f32 %v391, %v407
    %v409 = vld [vmem:[#allocation2] sm:$0xff]
    %v410 = vsel %vm190, %v408, -inf
    %411 = vmax.xlane.f32.xlu0 %v410
    %v412 = vpop.xlane.xlu0 %411
    %v413 = vmax.f32 %v409, %v412
    %v414 = vsub.f32 %v409, %v413
    %v415 = vmul.f32 %v414, 1.442695
    %v416 = vpow.pop %v415
    %418 = vset.pattern.permute.xlu0 1
    %419 = vperm.xlu0 %418, %v413
    %v420 = vpop.permute.xlu0 %419
    %v422 = vsub.f32 %v408, %v420
    %v423 = vmul.f32 %v422, 1.442695
    %v424 = vpow.pop %v423
    %v425 = vld [vmem:[#allocation3] sm:$0xff]
    %v426 = vmul.f32 %v416, %v425
    %v427 = vsel %vm190, %v424, 0.0
    %428 = vadd.xlane.f32.xlu0 %v427
    %v429 = vpop.xlane.xlu0 %428
    %v430 = vadd.f32 %v426, %v429
    %vm431 = vcmask 15368
    %432 = vst.msk [vmem:[#allocation3] sm:$0xff] %vm431, %v430
    %v433 = vld [vmem:[#allocation4] sm:$0xff]
    %435 = vset.pattern.permute.xlu0 1
    %436 = vperm.xlu0 %435, %v416
    %v437 = vpop.permute.xlu0 %436
    %v439 = vmul.f32 %v437, %v433
    %v440 = vpack.c.bf16 %v424, %v424
    %v441 = vld [vmem:[%s2] sm:$0xf]
    %v443 = vunpack.c.l.b16 %v441
    %v444 = vpack.c.b16 %v443, %v443
    %445 = vrot.lane.b32.xlu0 %v444, 120
    %v446 = vpop.permute.xlu0 %445
    %v448 = vsel %vm190, %v440, 0
    %v451 = vsel %vm226, %v446, 0
    %453 = vmatprep.subr.bf16.mxu0 0
    %454 = vmatpush1.bf16.msra.mxu0 0
    %455 = vmatprep.subr.bf16.mxu0 0
    %456 = vmatpush1.bf16.msra.mxu0 0
    %457 = vmatprep.subr.bf16.mxu0 0
    %458 = vmatpush1.bf16.msra.mxu0 0
    %459 = vmatprep.subr.bf16.mxu0 0
    %460 = vmatpush1.bf16.msra.mxu0 0
    %461 = vmatprep.subr.bf16.mxu0 0
    %462 = vmatpush1.bf16.msra.mxu0 0
    %463 = vmatprep.subr.bf16.mxu0 0
    %464 = vmatpush1.bf16.msra.mxu0 0
    %465 = vmatprep.subr.bf16.mxu0 0
    %466 = vmatpush1.bf16.msra.mxu0 0
    %467 = vmatprep.subr.bf16.mxu0 0
    %468 = vmatpush1.bf16.msra.mxu0 %v451
    %469 = vmatprep.subr.bf16.mxu0 0
    %470 = vmatpush2.bf16.msra.mxu0 0
    %471 = vmatprep.subr.bf16.mxu0 0
    %472 = vmatpush2.bf16.msra.mxu0 0
    %473 = vmatprep.subr.bf16.mxu0 0
    %474 = vmatpush2.bf16.msra.mxu0 0
    %475 = vmatprep.subr.bf16.mxu0 0
    %476 = vmatpush2.bf16.msra.mxu0 0
    %477 = vmatprep.subr.bf16.mxu0 0
    %478 = vmatpush2.bf16.msra.mxu0 0
    %479 = vmatprep.subr.bf16.mxu0 0
    %480 = vmatpush2.bf16.msra.mxu0 0
    %481 = vmatprep.subr.bf16.mxu0 0
    %482 = vmatpush2.bf16.msra.mxu0 0
    %483 = vmatprep.subr.bf16.mxu0 0
    %484 = vmatpush2.bf16.msra.mxu0 0
    %485 = vmatprep.mubr.bf16.mxu0 0
    %486 = vmatmul.mubr.bf16.gmra.mxu0 %v448
    %v487 = vpop.f32.mrf.mxu0
    %v488 = vadd.f32 0.0, %v487
    %v489 = vpop.f32.mrf.mxu0
    %v490 = vpop.f32.mrf.mxu0
    %v491 = vpop.f32.mrf.mxu0
    %492 = vdwg.mxu0
    %494 = vrot.lane.b32.xlu0 %v488, 8
    %v495 = vpop.permute.xlu0 %494
    %v497 = vadd.f32 %v439, %v495
    %vm498 = vcmask 130112
    %499 = vst.msk [vmem:[#allocation4] sm:$0xff] %vm498, %v497
    %500 = vst.msk [vmem:[#allocation2] sm:$0xff] %vm431, %v413
    // Predicated region
    $region30: #{tpu_custom_call.1} parent=1 // pred_check
      %p501 = pneg %p35
    $region31: #{tpu_custom_call.1} parent=1 // pred_check_branch
      %503 = sbr.rel (%p501) target = $region33
    $region32: #{tpu_custom_call.1} parent=1 // pred_region
      %v504 = vld [vmem:[#allocation3] sm:$0xff]
      %v505 = vrcp.pop %v504
      %v506 = vmul.f32 1.0, %v505
      %v507 = vld [vmem:[#allocation4] sm:$0xff]
      %509 = vset.pattern.permute.xlu0 0
      %510 = vperm.xlu0 %509, %v506
      %v511 = vpop.permute.xlu0 %510
      %v513 = vmul.f32 %v507, %v511
      %514 = vset.pattern.permute.xlu0 1
      %515 = vperm.xlu0 %514, %v506
      %v516 = vpop.permute.xlu0 %515
      %v518 = vmul.f32 %v507, %v516
      %v519 = vld [vmem:[#allocation2] sm:$0xff]
      %521 = vrot.lane.b32.xlu0 %v519, 16
      %v522 = vpop.permute.xlu0 %521
      %525 = vrot.lane.b32.xlu0 %v504, 18
      %v526 = vpop.permute.xlu0 %525
      %v528 = vsel %vm190, %v513, %v518
      %vm529 = vcmask 130048
      %v530 = vsel %vm529, %v528, %v522
      %vm531 = vcmask 146432
      %v532 = vsel %vm531, %v530, %v526
      %vm533 = vcmask 162816
      %v534 = vsel %vm533, %v532, 0.0
      %535 = vst [vmem:[#allocation8] sm:$0xff] %v534
    $region33: #{tpu_custom_call.1} parent=1 // pred_fallthru
      _
    // Predicated region
    $region34: #{tpu_custom_call.1} parent=1 // pred_check
      _
    $region35: #{tpu_custom_call.1} parent=1 // pred_check_branch
      %537 = sbr.rel (0) target = $region37
    $region36: #{tpu_custom_call.1} parent=1 // pred_region
      %s539 = ssub.s32 128, 128
      %540 = vsyncadd [#allocation6], %s539
      %s542 = sshll.u32 [#allocation8], 4
      %s543 = int_to_ptr.vmem [resolvable:$true] %s542
      %545 = dma.vmem_to_hbm [thread:$0]  %s543, 128, %s5, [#allocation6]
    $region37: #{tpu_custom_call.1} parent=1 // pred_fallthru
      _
    // Predicated region
    $region38: #{tpu_custom_call.1} parent=1 // pred_check
      _
    $region39: #{tpu_custom_call.1} parent=1 // pred_check_branch
      %547 = sbr.rel (0) target = $region41
    $region40: #{tpu_custom_call.1} parent=1 // pred_region
      %548 = dma.done [#allocation6], 128
    $region41: #{tpu_custom_call.1} parent=1 // pred_fallthru
      _
    %549 = vsyncpa [#allocation6], 1
    %550 = vsyncpa [#allocation7], 1

</llo_original>
